<compile_context>
chip_gen: v6e
topology: v6e:2x2x1
jax: 0.10.0
libtpu: 0.0.40
codegen_flags: <defaults>
</compile_context>

<pallas_src>
import math

import jax
import jax.numpy as jnp
from jax import lax
from jax.experimental import pallas as pl
from jax.experimental.pallas import tpu as pltpu


_INV_SQRT2 = 1.0 / math.sqrt(2.0)
_EXP_HALF = math.exp(0.5)


def _gelu_exact(x):
    # matches torch.nn.functional.gelu (erf-based, not tanh approximation)
    return 0.5 * x * (1.0 + lax.erf(x * _INV_SQRT2))


def _softplus(x):
    # matches torch.nn.Softplus(beta=1, threshold=20)
    return jnp.where(x > 20.0, x, jnp.log1p(jnp.exp(jnp.minimum(x, 20.0))))


def encoder_kernel(x_ref, w1_ref, b1_ref, w2_ref, b2_ref,
                   w3_ref, b3_ref, w4_ref, b4_ref, eps_ref,
                   mu_ref, logvar_ref, z_ref):
    mm_dtype = x_ref.dtype  # bf16 matmul inputs, f32 accumulation
    h1 = _gelu_exact(
        jnp.dot(x_ref[...], w1_ref[...], preferred_element_type=jnp.float32)
        + b1_ref[...])
    h2 = _gelu_exact(
        jnp.dot(h1.astype(mm_dtype), w2_ref[...],
                preferred_element_type=jnp.float32) + b2_ref[...])
    h2m = h2.astype(mm_dtype)
    mu = (jnp.dot(h2m, w3_ref[...], preferred_element_type=jnp.float32)
          + b3_ref[...])
    logvar = _softplus(
        jnp.dot(h2m, w4_ref[...], preferred_element_type=jnp.float32)
        + b4_ref[...])
    # NB: the PyTorch module really computes std = exp(0.5 + logvar)
    #     (== exp(0.5) * exp(logvar)), not exp(0.5 * logvar).
    std = _EXP_HALF * jnp.exp(logvar)
    mu_ref[...] = mu
    logvar_ref[...] = logvar
    z_ref[...] = eps_ref[...] * std + mu


def _pick_tile_rows(R, target=512):
    # ~512-row tiles are the mem-bound sweet spot; multiples of 16 keep bf16
    # sublane packing aligned. Small inputs collapse to a single tile.
    if R <= target:
        return max(16, ((R + 15) // 16) * 16)
    return target


def encoder_forward(xt, xs, kparams, eps):
    # TODO(synk): SpatialTemporalTransformerBlock is not defined in the provided
    # source, so the encoder_blocks loop is treated as identity (xt, xs pass through).
    B, W, Dm = xt.shape
    FF = kparams["w1"].shape[1]
    H = kparams["w3"].shape[1]
    R = B * W
    mm_dtype = kparams["w1"].dtype

    TR = _pick_tile_rows(R)
    num_tiles = -(-R // TR)
    R_pad = num_tiles * TR

    x_flat = xt.reshape(R, Dm).astype(mm_dtype)
    eps_flat = eps.reshape(R, H)
    if R_pad != R:
        x_flat = jnp.pad(x_flat, ((0, R_pad - R), (0, 0)))
        eps_flat = jnp.pad(eps_flat, ((0, R_pad - R), (0, 0)))

    def row_spec(c):
        return pl.BlockSpec((TR, c), lambda i: (i, 0))

    def resident(shape):
        # Same block index for every grid step -> stays VMEM-resident.
        return pl.BlockSpec(shape, lambda i: (0, 0))

    itemsize = jnp.dtype(mm_dtype).itemsize
    weight_bytes = sum(int(v.size) * v.dtype.itemsize for v in kparams.values())
    cost = pl.CostEstimate(
        flops=2 * R_pad * (Dm * FF + FF * Dm + 2 * Dm * H),
        transcendentals=R_pad * (FF + Dm + 2 * H),
        bytes_accessed=(R_pad * Dm * itemsize + R_pad * H * 4
                        + weight_bytes + 3 * R_pad * H * 4),
    )

    mu, logvar, z = pl.pallas_call(
        encoder_kernel,
        grid=(num_tiles,),
        in_specs=[
            row_spec(Dm),                                   # x
            resident((Dm, FF)), resident((1, FF)),          # w1, b1
            resident((FF, Dm)), resident((1, Dm)),          # w2, b2
            resident((Dm, H)), resident((1, H)),            # w3, b3
            resident((Dm, H)), resident((1, H)),            # w4, b4
            row_spec(H),                                    # eps
        ],
        out_specs=[row_spec(H), row_spec(H), row_spec(H)],
        out_shape=[jax.ShapeDtypeStruct((R_pad, H), jnp.float32)
                   for _ in range(3)],
        compiler_params=pltpu.CompilerParams(
            dimension_semantics=("parallel",),
            vmem_limit_bytes=32 * 1024 * 1024),
        cost_estimate=cost,
    )(x_flat, kparams["w1"], kparams["b1"], kparams["w2"], kparams["b2"],
      kparams["w3"], kparams["b3"], kparams["w4"], kparams["b4"], eps_flat)

    if R_pad != R:
        mu, logvar, z = mu[:R], logvar[:R], z[:R]
    mu = mu.reshape(B, W, H)
    logvar = logvar.reshape(B, W, H)
    z = z.reshape(B, W, H)
    return mu, logvar, z, xt


def init_params(key, model_dim, ff_dim, hidden_dim):
    # kaiming_normal_(mode='fan_in', nonlinearity='leaky_relu'):
    #   gain = sqrt(2 / (1 + 0.01^2)), std = gain / sqrt(fan_in), fan_in = in_ch * 1
    gain = math.sqrt(2.0 / (1.0 + 0.01 ** 2))

    def kaiming(k, out_ch, in_ch):
        std = gain / math.sqrt(in_ch)
        return jax.random.normal(k, (out_ch, in_ch), jnp.float32) * std

    def bias(k, out_ch, in_ch):
        bound = 1.0 / math.sqrt(in_ch)  # default Conv1d bias init
        return jax.random.uniform(k, (1, out_ch), jnp.float32, -bound, bound)

    ks = jax.random.split(key, 8)
    w1 = kaiming(ks[0], ff_dim, model_dim);     b1 = bias(ks[1], ff_dim, model_dim)
    w2 = kaiming(ks[2], model_dim, ff_dim);     b2 = bias(ks[3], model_dim, ff_dim)
    w3 = kaiming(ks[4], hidden_dim, model_dim); b3 = bias(ks[5], hidden_dim, model_dim)
    w4 = kaiming(ks[6], hidden_dim, model_dim); b4 = bias(ks[7], hidden_dim, model_dim)
    # store transposed as (in_ch, out_ch) so the kernel does x @ W
    return {"w1": w1.T, "b1": b1, "w2": w2.T, "b2": b2,
            "w3": w3.T, "b3": b3, "w4": w4.T, "b4": b4}


def prepare_params(params, matmul_dtype=jnp.bfloat16):
    # One-time cast of matmul weights to bf16 (MXU-native on v5e/v6e/v7x);
    # biases stay f32 (added to the f32 accumulator). Hoisted out of forward.
    return {
        "w1": params["w1"].astype(matmul_dtype), "b1": params["b1"],
        "w2": params["w2"].astype(matmul_dtype), "b2": params["b2"],
        "w3": params["w3"].astype(matmul_dtype), "b3": params["b3"],
        "w4": params["w4"].astype(matmul_dtype), "b4": params["b4"],
    }


def reference_forward(xt, params, eps, matmul_dtype=None):
    # Pure-JAX reference. matmul_dtype applies the same MXU precision policy
    # as the kernel (bf16 inputs, f32 accumulation) at the same cast points.
    def mm(a, w):
        if matmul_dtype is not None:
            a = a.astype(matmul_dtype)
            w = w.astype(matmul_dtype)
        return jnp.dot(a, w, preferred_element_type=jnp.float32)

    h1 = _gelu_exact(mm(xt, params["w1"]) + params["b1"])
    h2 = _gelu_exact(mm(h1, params["w2"]) + params["b2"])
    mu = mm(h2, params["w3"]) + params["b3"]
    logvar = _softplus(mm(h2, params["w4"]) + params["b4"])
    z = eps * jnp.exp(0.5 + logvar) + mu
    return mu, logvar, z


if __name__ == "__main__":
    # Small shapes consistent with the module:
    B, window_size, feature_num = 2, 8, 4
    model_dim, ff_dim, hidden_dim = 32, 64, 16

    key = jax.random.PRNGKey(0)
    k_xt, k_xs, k_eps, k_par = jax.random.split(key, 4)

    xt = jax.random.normal(k_xt, (B, window_size, model_dim), jnp.float32)
    xs = jax.random.normal(k_xs, (B, feature_num, model_dim), jnp.float32)
    # TODO(synk): the module draws eps = torch.randn_like(std) internally; it is
    # taken as an explicit input here for determinism.
    eps = jax.random.normal(k_eps, (B, window_size, hidden_dim), jnp.float32)

    params = init_params(k_par, model_dim, ff_dim, hidden_dim)
    kparams = prepare_params(params)  # bf16 weights, cast once outside forward

    fwd = jax.jit(encoder_forward)
    mu, logvar, z, xt_out = fwd(xt, xs, kparams, eps)
    jax.block_until_ready((mu, logvar, z, xt_out))

    # Compare against a reference with the same matmul precision policy.
    mu_r, logvar_r, z_r = reference_forward(xt, params, eps,
                                            matmul_dtype=jnp.bfloat16)
    assert jnp.allclose(mu, mu_r, rtol=5e-3, atol=5e-3)
    assert jnp.allclose(logvar, logvar_r, rtol=5e-3, atol=5e-3)
    assert jnp.allclose(z, z_r, rtol=5e-3, atol=5e-3)
    assert jnp.array_equal(xt_out, xt)

    print("KERNEL_OK")
</pallas_src>

<mosaic_0001>
module attributes {stable_mosaic.version = 11 : i64} {
  func.func @encoder_kernel(%arg0: i32, %arg1: memref<16x32xbf16, #tpu.memory_space<vmem>>, %arg2: memref<32x64xbf16, #tpu.memory_space<vmem>>, %arg3: memref<1x64xf32, #tpu.memory_space<vmem>>, %arg4: memref<64x32xbf16, #tpu.memory_space<vmem>>, %arg5: memref<1x32xf32, #tpu.memory_space<vmem>>, %arg6: memref<32x16xbf16, #tpu.memory_space<vmem>>, %arg7: memref<1x16xf32, #tpu.memory_space<vmem>>, %arg8: memref<32x16xbf16, #tpu.memory_space<vmem>>, %arg9: memref<1x16xf32, #tpu.memory_space<vmem>>, %arg10: memref<16x16xf32, #tpu.memory_space<vmem>>, %arg11: memref<16x16xf32, #tpu.memory_space<vmem>>, %arg12: memref<16x16xf32, #tpu.memory_space<vmem>>, %arg13: memref<16x16xf32, #tpu.memory_space<vmem>>) attributes {dimension_semantics = [#tpu.dimension_semantics<parallel>], iteration_bounds = array<i64: 1>, scalar_prefetch = 0 : i64, scratch_operands = 0 : i64, tpu.core_type = #tpu.core_type<tc>, window_params = [{transform_indices = @transform_0, window_bounds = array<i64: 16, 32>}, {pipeline_mode = #tpu.pipeline_mode<synchronous>, transform_indices = @transform_1, window_bounds = array<i64: 32, 64>}, {pipeline_mode = #tpu.pipeline_mode<synchronous>, transform_indices = @transform_2, window_bounds = array<i64: 1, 64>}, {pipeline_mode = #tpu.pipeline_mode<synchronous>, transform_indices = @transform_3, window_bounds = array<i64: 64, 32>}, {pipeline_mode = #tpu.pipeline_mode<synchronous>, transform_indices = @transform_4, window_bounds = array<i64: 1, 32>}, {pipeline_mode = #tpu.pipeline_mode<synchronous>, transform_indices = @transform_5, window_bounds = array<i64: 32, 16>}, {pipeline_mode = #tpu.pipeline_mode<synchronous>, transform_indices = @transform_6, window_bounds = array<i64: 1, 16>}, {pipeline_mode = #tpu.pipeline_mode<synchronous>, transform_indices = @transform_7, window_bounds = array<i64: 32, 16>}, {pipeline_mode = #tpu.pipeline_mode<synchronous>, transform_indices = @transform_8, window_bounds = array<i64: 1, 16>}, {transform_indices = @transform_9, window_bounds = array<i64: 16, 16>}, {transform_indices = @transform_10, window_bounds = array<i64: 16, 16>}, {transform_indices = @transform_11, window_bounds = array<i64: 16, 16>}, {transform_indices = @transform_12, window_bounds = array<i64: 16, 16>}]} {
    %c0 = arith.constant 0 : index
    %c0_0 = arith.constant 0 : index
    %0 = vector.load %arg1[%c0, %c0_0] : memref<16x32xbf16, #tpu.memory_space<vmem>>, vector<16x32xbf16>
    %c0_1 = arith.constant 0 : index
    %c0_2 = arith.constant 0 : index
    %1 = vector.load %arg2[%c0_1, %c0_2] : memref<32x64xbf16, #tpu.memory_space<vmem>>, vector<32x64xbf16>
    %cst = arith.constant dense<0.000000e+00> : vector<16x64xf32>
    %2 = tpu.matmul %0, %1, %cst {dimension_numbers = #tpu.dot_dimension_numbers<[1], [0], [0], [1], [0, 0, 1, 1], [], []>} : vector<16x32xbf16>, vector<32x64xbf16>, vector<16x64xf32> -> vector<16x64xf32>
    %c0_3 = arith.constant 0 : index
    %c0_4 = arith.constant 0 : index
    %3 = vector.load %arg3[%c0_3, %c0_4] : memref<1x64xf32, #tpu.memory_space<vmem>>, vector<1x64xf32>
    %4 = vector.broadcast %3 : vector<1x64xf32> to vector<16x64xf32>
    %5 = arith.addf %2, %4 : vector<16x64xf32>
    %cst_5 = arith.constant 5.000000e-01 : f32
    %6 = vector.broadcast %cst_5 : f32 to vector<16x64xf32>
    %7 = arith.mulf %6, %5 : vector<16x64xf32>
    %cst_6 = arith.constant 0.707106769 : f32
    %8 = vector.broadcast %cst_6 : f32 to vector<16x64xf32>
    %9 = arith.mulf %5, %8 : vector<16x64xf32>
    %10 = math.erf %9 : vector<16x64xf32>
    %cst_7 = arith.constant 1.000000e+00 : f32
    %11 = vector.broadcast %cst_7 : f32 to vector<16x64xf32>
    %12 = arith.addf %11, %10 : vector<16x64xf32>
    %13 = arith.mulf %7, %12 : vector<16x64xf32>
    %14 = arith.truncf %13 : vector<16x64xf32> to vector<16x64xbf16>
    %c0_8 = arith.constant 0 : index
    %c0_9 = arith.constant 0 : index
    %15 = vector.load %arg4[%c0_8, %c0_9] : memref<64x32xbf16, #tpu.memory_space<vmem>>, vector<64x32xbf16>
    %cst_10 = arith.constant dense<0.000000e+00> : vector<16x32xf32>
    %16 = tpu.matmul %14, %15, %cst_10 {dimension_numbers = #tpu.dot_dimension_numbers<[1], [0], [0], [1], [0, 0, 1, 1], [], []>} : vector<16x64xbf16>, vector<64x32xbf16>, vector<16x32xf32> -> vector<16x32xf32>
    %c0_11 = arith.constant 0 : index
    %c0_12 = arith.constant 0 : index
    %17 = vector.load %arg5[%c0_11, %c0_12] : memref<1x32xf32, #tpu.memory_space<vmem>>, vector<1x32xf32>
    %18 = vector.broadcast %17 : vector<1x32xf32> to vector<16x32xf32>
    %19 = arith.addf %16, %18 : vector<16x32xf32>
    %cst_13 = arith.constant 5.000000e-01 : f32
    %20 = vector.broadcast %cst_13 : f32 to vector<16x32xf32>
    %21 = arith.mulf %20, %19 : vector<16x32xf32>
    %cst_14 = arith.constant 0.707106769 : f32
    %22 = vector.broadcast %cst_14 : f32 to vector<16x32xf32>
    %23 = arith.mulf %19, %22 : vector<16x32xf32>
    %24 = math.erf %23 : vector<16x32xf32>
    %cst_15 = arith.constant 1.000000e+00 : f32
    %25 = vector.broadcast %cst_15 : f32 to vector<16x32xf32>
    %26 = arith.addf %25, %24 : vector<16x32xf32>
    %27 = arith.mulf %21, %26 : vector<16x32xf32>
    %28 = arith.truncf %27 : vector<16x32xf32> to vector<16x32xbf16>
    %c0_16 = arith.constant 0 : index
    %c0_17 = arith.constant 0 : index
    %29 = vector.load %arg6[%c0_16, %c0_17] : memref<32x16xbf16, #tpu.memory_space<vmem>>, vector<32x16xbf16>
    %cst_18 = arith.constant dense<0.000000e+00> : vector<16x16xf32>
    %30 = tpu.matmul %28, %29, %cst_18 {dimension_numbers = #tpu.dot_dimension_numbers<[1], [0], [0], [1], [0, 0, 1, 1], [], []>} : vector<16x32xbf16>, vector<32x16xbf16>, vector<16x16xf32> -> vector<16x16xf32>
    %c0_19 = arith.constant 0 : index
    %c0_20 = arith.constant 0 : index
    %31 = vector.load %arg7[%c0_19, %c0_20] : memref<1x16xf32, #tpu.memory_space<vmem>>, vector<1x16xf32>
    %32 = vector.broadcast %31 : vector<1x16xf32> to vector<16x16xf32>
    %33 = arith.addf %30, %32 : vector<16x16xf32>
    %c0_21 = arith.constant 0 : index
    %c0_22 = arith.constant 0 : index
    %34 = vector.load %arg8[%c0_21, %c0_22] : memref<32x16xbf16, #tpu.memory_space<vmem>>, vector<32x16xbf16>
    %cst_23 = arith.constant dense<0.000000e+00> : vector<16x16xf32>
    %35 = tpu.matmul %28, %34, %cst_23 {dimension_numbers = #tpu.dot_dimension_numbers<[1], [0], [0], [1], [0, 0, 1, 1], [], []>} : vector<16x32xbf16>, vector<32x16xbf16>, vector<16x16xf32> -> vector<16x16xf32>
    %c0_24 = arith.constant 0 : index
    %c0_25 = arith.constant 0 : index
    %36 = vector.load %arg9[%c0_24, %c0_25] : memref<1x16xf32, #tpu.memory_space<vmem>>, vector<1x16xf32>
    %37 = vector.broadcast %36 : vector<1x16xf32> to vector<16x16xf32>
    %38 = arith.addf %35, %37 : vector<16x16xf32>
    %cst_26 = arith.constant 2.000000e+01 : f32
    %39 = vector.broadcast %cst_26 : f32 to vector<16x16xf32>
    %40 = arith.cmpf ogt, %38, %39 : vector<16x16xf32>
    %cst_27 = arith.constant 2.000000e+01 : f32
    %41 = vector.broadcast %cst_27 : f32 to vector<16x16xf32>
    %42 = arith.minimumf %38, %41 : vector<16x16xf32>
    %43 = math.exp %42 : vector<16x16xf32>
    %44 = math.log1p %43 : vector<16x16xf32>
    %45 = arith.select %40, %38, %44 : vector<16x16xi1>, vector<16x16xf32>
    %46 = math.exp %45 : vector<16x16xf32>
    %cst_28 = arith.constant 1.64872122 : f32
    %47 = vector.broadcast %cst_28 : f32 to vector<16x16xf32>
    %48 = arith.mulf %47, %46 : vector<16x16xf32>
    %c0_29 = arith.constant 0 : index
    %c0_30 = arith.constant 0 : index
    %49 = vector.load %arg11[%c0_29, %c0_30] : memref<16x16xf32, #tpu.memory_space<vmem>>, vector<16x16xf32>
    tpu.vector_store %arg11[%c0_29, %c0_30], %33 {strides = array<i32>} : memref<16x16xf32, #tpu.memory_space<vmem>>, vector<16x16xf32>,
    %c0_31 = arith.constant 0 : index
    %c0_32 = arith.constant 0 : index
    %50 = vector.load %arg12[%c0_31, %c0_32] : memref<16x16xf32, #tpu.memory_space<vmem>>, vector<16x16xf32>
    tpu.vector_store %arg12[%c0_31, %c0_32], %45 {strides = array<i32>} : memref<16x16xf32, #tpu.memory_space<vmem>>, vector<16x16xf32>,
    %c0_33 = arith.constant 0 : index
    %c0_34 = arith.constant 0 : index
    %51 = vector.load %arg10[%c0_33, %c0_34] : memref<16x16xf32, #tpu.memory_space<vmem>>, vector<16x16xf32>
    %52 = arith.mulf %51, %48 : vector<16x16xf32>
    %53 = arith.addf %52, %33 : vector<16x16xf32>
    %c0_35 = arith.constant 0 : index
    %c0_36 = arith.constant 0 : index
    %54 = vector.load %arg13[%c0_35, %c0_36] : memref<16x16xf32, #tpu.memory_space<vmem>>, vector<16x16xf32>
    tpu.vector_store %arg13[%c0_35, %c0_36], %53 {strides = array<i32>} : memref<16x16xf32, #tpu.memory_space<vmem>>, vector<16x16xf32>,
    return
  }
  func.func @transform_0(%arg0: i32) -> (i32, i32) {
    %c0_i32 = arith.constant 0 : i32
    %c0_i32_0 = arith.constant 0 : i32
    return %arg0, %c0_i32 : i32, i32
  }
  func.func @transform_1(%arg0: i32) -> (i32, i32) {
    %c0_i32 = arith.constant 0 : i32
    %c0_i32_0 = arith.constant 0 : i32
    %c0_i32_1 = arith.constant 0 : i32
    return %c0_i32, %c0_i32_0 : i32, i32
  }
  func.func @transform_2(%arg0: i32) -> (i32, i32) {
    %c0_i32 = arith.constant 0 : i32
    %c0_i32_0 = arith.constant 0 : i32
    %c0_i32_1 = arith.constant 0 : i32
    return %c0_i32, %c0_i32_0 : i32, i32
  }
  func.func @transform_3(%arg0: i32) -> (i32, i32) {
    %c0_i32 = arith.constant 0 : i32
    %c0_i32_0 = arith.constant 0 : i32
    %c0_i32_1 = arith.constant 0 : i32
    return %c0_i32, %c0_i32_0 : i32, i32
  }
  func.func @transform_4(%arg0: i32) -> (i32, i32) {
    %c0_i32 = arith.constant 0 : i32
    %c0_i32_0 = arith.constant 0 : i32
    %c0_i32_1 = arith.constant 0 : i32
    return %c0_i32, %c0_i32_0 : i32, i32
  }
  func.func @transform_5(%arg0: i32) -> (i32, i32) {
    %c0_i32 = arith.constant 0 : i32
    %c0_i32_0 = arith.constant 0 : i32
    %c0_i32_1 = arith.constant 0 : i32
    return %c0_i32, %c0_i32_0 : i32, i32
  }
  func.func @transform_6(%arg0: i32) -> (i32, i32) {
    %c0_i32 = arith.constant 0 : i32
    %c0_i32_0 = arith.constant 0 : i32
    %c0_i32_1 = arith.constant 0 : i32
    return %c0_i32, %c0_i32_0 : i32, i32
  }
  func.func @transform_7(%arg0: i32) -> (i32, i32) {
    %c0_i32 = arith.constant 0 : i32
    %c0_i32_0 = arith.constant 0 : i32
    %c0_i32_1 = arith.constant 0 : i32
    return %c0_i32, %c0_i32_0 : i32, i32
  }
  func.func @transform_8(%arg0: i32) -> (i32, i32) {
    %c0_i32 = arith.constant 0 : i32
    %c0_i32_0 = arith.constant 0 : i32
    %c0_i32_1 = arith.constant 0 : i32
    return %c0_i32, %c0_i32_0 : i32, i32
  }
  func.func @transform_9(%arg0: i32) -> (i32, i32) {
    %c0_i32 = arith.constant 0 : i32
    %c0_i32_0 = arith.constant 0 : i32
    return %arg0, %c0_i32 : i32, i32
  }
  func.func @transform_10(%arg0: i32) -> (i32, i32) {
    %c0_i32 = arith.constant 0 : i32
    %c0_i32_0 = arith.constant 0 : i32
    return %arg0, %c0_i32 : i32, i32
  }
  func.func @transform_11(%arg0: i32) -> (i32, i32) {
    %c0_i32 = arith.constant 0 : i32
    %c0_i32_0 = arith.constant 0 : i32
    return %arg0, %c0_i32 : i32, i32
  }
  func.func @transform_12(%arg0: i32) -> (i32, i32) {
    %c0_i32 = arith.constant 0 : i32
    %c0_i32_0 = arith.constant 0 : i32
    return %arg0, %c0_i32 : i32, i32
  }
}

</mosaic_0001>

<llo_original>
// kernel: encoder_forward.1
$region0: #{encoder_forward.1}
  #allocation0 [shape = 'u32[]', space=smem, size = 0x4, offset = 0x4, fixed_abs, tag = 'smem constant byte address 0x4 - core index']
  #allocation1 [shape = 'u32[144,128]{1,0:T(1,128)}', space=vmem, size = 0x12000, scoped, tag = 'internal scratch']
  %s0 = inlined_call_operand.vmem [shape: bf16[16,32], index: 0, kind: input, shape index: {}]
  %s1 = inlined_call_operand.vmem [shape: bf16[32,64], index: 1, kind: input, shape index: {}]
  %s2 = inlined_call_operand.vmem [shape: f32[1,64], index: 2, kind: input, shape index: {}]
  %s3 = inlined_call_operand.vmem [shape: bf16[64,32], index: 3, kind: input, shape index: {}]
  %s4 = inlined_call_operand.vmem [shape: f32[1,32], index: 4, kind: input, shape index: {}]
  %s5 = inlined_call_operand.vmem [shape: bf16[32,16], index: 5, kind: input, shape index: {}]
  %s6 = inlined_call_operand.vmem [shape: f32[1,16], index: 6, kind: input, shape index: {}]
  %s7 = inlined_call_operand.vmem [shape: bf16[32,16], index: 7, kind: input, shape index: {}]
  %s8 = inlined_call_operand.vmem [shape: f32[1,16], index: 8, kind: input, shape index: {}]
  %s9 = inlined_call_operand.vmem [shape: f32[16,16], index: 9, kind: input, shape index: {}]
  %s10 = inlined_call_operand.hbm [shape: f32[16,16], index: 10, kind: output, shape index: {0}]
  %s11 = inlined_call_operand.hbm [shape: f32[16,16], index: 11, kind: output, shape index: {1}]
  %s12 = inlined_call_operand.hbm [shape: f32[16,16], index: 12, kind: output, shape index: {2}]
  %13 = xla_tuple %s10, %s11, %s12
  %s14 = sld [smem:[#allocation0]]
  $region66: #{encoder_forward.1} parent=0
    _
  %s16 = ssub.s32 1, %s14
  %s17 = scalar_select 0, %s16, %s14
  $region1: #{encoder_forward.1} parent=0
    #allocation2 [shape = 'u8[8192]{0}', space=vmem, size = 0x2000, scoped, tag = 'output window, operand 0, single buffered']
    #allocation3 [shape = 's32[1]{0}', space=sflag, size = 0x4, scoped, tag = 'scoped memory for encoder_forward.1']
    #allocation4 [shape = 'u8[8192]{0}', space=vmem, size = 0x2000, scoped, tag = 'output window, operand 1, single buffered']
    #allocation5 [shape = 's32[1]{0}', space=sflag, size = 0x4, scoped, tag = 'scoped memory for encoder_forward.1']
    #allocation6 [shape = 'u8[8192]{0}', space=vmem, size = 0x2000, scoped, tag = 'output window, operand 2, single buffered']
    %18 = vsyncpa [#allocation3], 0
    %19 = vsyncpa [#allocation5], 0
    // Predicated region
    $region2: #{encoder_forward.1} parent=1 // pred_check
      _
    $region3: #{encoder_forward.1} parent=1 // pred_check_branch
      %21 = sbr.rel (0) target = $region5
    $region4: #{encoder_forward.1} parent=1 // pred_region
      _
    $region5: #{encoder_forward.1} parent=1 // pred_fallthru
      _
    // Predicated region
    $region6: #{encoder_forward.1} parent=1 // pred_check
      _
    $region7: #{encoder_forward.1} parent=1 // pred_check_branch
      %23 = sbr.rel (0) target = $region9
    $region8: #{encoder_forward.1} parent=1 // pred_region
      _
    $region9: #{encoder_forward.1} parent=1 // pred_fallthru
      _
    // Predicated region
    $region10: #{encoder_forward.1} parent=1 // pred_check
      _
    $region11: #{encoder_forward.1} parent=1 // pred_check_branch
      %25 = sbr.rel (0) target = $region13
    $region12: #{encoder_forward.1} parent=1 // pred_region
      _
    $region13: #{encoder_forward.1} parent=1 // pred_fallthru
      _
    // Predicated region
    $region14: #{encoder_forward.1} parent=1 // pred_check
      _
    $region15: #{encoder_forward.1} parent=1 // pred_check_branch
      %27 = sbr.rel (0) target = $region17
    $region16: #{encoder_forward.1} parent=1 // pred_region
      _
    $region17: #{encoder_forward.1} parent=1 // pred_fallthru
      _
    // Predicated region
    $region18: #{encoder_forward.1} parent=1 // pred_check
      _
    $region19: #{encoder_forward.1} parent=1 // pred_check_branch
      %29 = sbr.rel (0) target = $region21
    $region20: #{encoder_forward.1} parent=1 // pred_region
      _
    $region21: #{encoder_forward.1} parent=1 // pred_fallthru
      _
    // Predicated region
    $region22: #{encoder_forward.1} parent=1 // pred_check
      _
    $region23: #{encoder_forward.1} parent=1 // pred_check_branch
      %31 = sbr.rel (0) target = $region25
    $region24: #{encoder_forward.1} parent=1 // pred_region
      _
    $region25: #{encoder_forward.1} parent=1 // pred_fallthru
      _
    // Predicated region
    $region26: #{encoder_forward.1} parent=1 // pred_check
      _
    $region27: #{encoder_forward.1} parent=1 // pred_check_branch
      %33 = sbr.rel (0) target = $region29
    $region28: #{encoder_forward.1} parent=1 // pred_region
      _
    $region29: #{encoder_forward.1} parent=1 // pred_fallthru
      _
    // Predicated region
    $region30: #{encoder_forward.1} parent=1 // pred_check
      _
    $region31: #{encoder_forward.1} parent=1 // pred_check_branch
      %35 = sbr.rel (0) target = $region33
    $region32: #{encoder_forward.1} parent=1 // pred_region
      _
    $region33: #{encoder_forward.1} parent=1 // pred_fallthru
      _
    // Predicated region
    $region34: #{encoder_forward.1} parent=1 // pred_check
      _
    $region35: #{encoder_forward.1} parent=1 // pred_check_branch
      %37 = sbr.rel (0) target = $region37
    $region36: #{encoder_forward.1} parent=1 // pred_region
      _
    $region37: #{encoder_forward.1} parent=1 // pred_fallthru
      _
    // Predicated region
    $region38: #{encoder_forward.1} parent=1 // pred_check
      _
    $region39: #{encoder_forward.1} parent=1 // pred_check_branch
      %39 = sbr.rel (0) target = $region41
    $region40: #{encoder_forward.1} parent=1 // pred_region
      _
    $region41: #{encoder_forward.1} parent=1 // pred_fallthru
      _
    %v41 = vld [vmem:[%s0] sm:$0xf]
    %v42 = vld [vmem:[%s0 + $0x4] sm:$0xf]
    %v43 = vld [vmem:[%s1] sm:$0xf]
    %v44 = vld [vmem:[%s1 + $0x4] sm:$0xf]
    %v45 = vld [vmem:[%s1 + $0x8] sm:$0xf]
    %v46 = vld [vmem:[%s1 + $0xc] sm:$0xf]
    %v47 = vld [vmem:[%s2] sm:$0x1]
    %v49 = vlaneseq
    %v50 = vshrl.u32 %v49, 7
    %v51 = vsub.s32 0, %v50
    %v52 = vrot.slane %v47, %v51
    %v56 = vunpack.c.l.b16 %v41
    %v57 = vunpack.c.l.b16 %v42
    %v58 = vpack.c.b16 %v57, %v56
    %v63 = vunpack.c.l.b16 %v43
    %v64 = vunpack.c.l.b16 %v44
    %v65 = vunpack.c.l.b16 %v45
    %v66 = vunpack.c.l.b16 %v46
    %v67 = vpack.c.b16 %v64, %v63
    %v68 = vpack.c.b16 %v66, %v65
    %vm71 = vcmask 261120
    %v73 = vsel %vm71, %v58, 0
    %75 = vmatprep.subr.bf16.mxu0 0
    %76 = vmatpush1.bf16.msra.mxu0 0
    %77 = vmatprep.subr.bf16.mxu0 0
    %78 = vmatpush1.bf16.msra.mxu0 0
    %79 = vmatprep.subr.bf16.mxu0 0
    %80 = vmatpush1.bf16.msra.mxu0 0
    %81 = vmatprep.subr.bf16.mxu0 0
    %82 = vmatpush1.bf16.msra.mxu0 0
    %83 = vmatprep.subr.bf16.mxu0 0
    %84 = vmatpush1.bf16.msra.mxu0 0
    %85 = vmatprep.subr.bf16.mxu0 0
    %86 = vmatpush1.bf16.msra.mxu0 0
    %87 = vmatprep.subr.bf16.mxu0 0
    %88 = vmatpush1.bf16.msra.mxu0 %v68
    %89 = vmatprep.subr.bf16.mxu0 0
    %90 = vmatpush1.bf16.msra.mxu0 %v67
    %91 = vmatprep.subr.bf16.mxu0 0
    %92 = vmatpush2.bf16.msra.mxu0 0
    %93 = vmatprep.subr.bf16.mxu0 0
    %94 = vmatpush2.bf16.msra.mxu0 0
    %95 = vmatprep.subr.bf16.mxu0 0
    %96 = vmatpush2.bf16.msra.mxu0 0
    %97 = vmatprep.subr.bf16.mxu0 0
    %98 = vmatpush2.bf16.msra.mxu0 0
    %99 = vmatprep.subr.bf16.mxu0 0
    %100 = vmatpush2.bf16.msra.mxu0 0
    %101 = vmatprep.subr.bf16.mxu0 0
    %102 = vmatpush2.bf16.msra.mxu0 0
    %103 = vmatprep.subr.bf16.mxu0 0
    %104 = vmatpush2.bf16.msra.mxu0 0
    %105 = vmatprep.subr.bf16.mxu0 0
    %106 = vmatpush2.bf16.msra.mxu0 0
    %107 = vmatprep.mubr.bf16.mxu0 0
    %108 = vmatmul.mubr.bf16.gmra.mxu0 %v73
    %v109 = vpop.f32.mrf.mxu0
    %v110 = vadd.f32 %v52, %v109
    %v111 = vpop.f32.mrf.mxu0
    %v112 = vpop.f32.mrf.mxu0
    %v113 = vadd.f32 %v52, %v112
    %v114 = vpop.f32.mrf.mxu0
    %115 = vdwg.mxu0
    %v116 = vmul.f32 %v110, 0.5
    %v117 = vmul.f32 %v113, 0.5
    %v118 = vmul.f32 %v110, 0.70710677
    %v119 = vmul.f32 %v113, 0.70710677
    %v120 = verf.f32.pop %v118
    %v121 = verf.f32.pop %v119
    %v122 = vadd.f32 %v120, 1.0
    %v123 = vadd.f32 %v121, 1.0
    %v124 = vmul.f32 %v116, %v122
    %v125 = vmul.f32 %v117, %v123
    %v126 = vpack.c.bf16 %v125, %v124
    %v127 = vld [vmem:[%s3] sm:$0xf]
    %v128 = vld [vmem:[%s3 + $0x4] sm:$0xf]
    %v129 = vld [vmem:[%s3 + $0x8] sm:$0xf]
    %v130 = vld [vmem:[%s3 + $0xc] sm:$0xf]
    %v131 = vld [vmem:[%s3 + $0x10] sm:$0xf]
    %v132 = vld [vmem:[%s3 + $0x14] sm:$0xf]
    %v133 = vld [vmem:[%s3 + $0x18] sm:$0xf]
    %v134 = vld [vmem:[%s3 + $0x1c] sm:$0xf]
    %v135 = vld [vmem:[%s4] sm:$0x1]
    %v137 = vlaneseq
    %v138 = vshrl.u32 %v137, 7
    %v139 = vsub.s32 0, %v138
    %v140 = vrot.slane %v135, %v139
    %v150 = vunpack.c.l.b16 %v127
    %v151 = vunpack.c.l.b16 %v128
    %v152 = vunpack.c.l.b16 %v129
    %v153 = vunpack.c.l.b16 %v130
    %v154 = vunpack.c.l.b16 %v131
    %v155 = vunpack.c.l.b16 %v132
    %v156 = vunpack.c.l.b16 %v133
    %v157 = vunpack.c.l.b16 %v134
    %v158 = vpack.c.b16 %v151, %v150
    %v159 = vpack.c.b16 %v153, %v152
    %v160 = vpack.c.b16 %v155, %v154
    %v161 = vpack.c.b16 %v157, %v156
    %vm166 = vcmask 523264
    %v168 = vsel %vm166, %v126, 0
    %170 = vmatprep.subr.bf16.mxu0 0
    %171 = vmatpush1.bf16.msra.mxu0 0
    %172 = vmatprep.subr.bf16.mxu0 0
    %173 = vmatpush1.bf16.msra.mxu0 0
    %174 = vmatprep.subr.bf16.mxu0 0
    %175 = vmatpush1.bf16.msra.mxu0 0
    %176 = vmatprep.subr.bf16.mxu0 0
    %177 = vmatpush1.bf16.msra.mxu0 0
    %178 = vmatprep.subr.bf16.mxu0 0
    %179 = vmatpush1.bf16.msra.mxu0 %v161
    %180 = vmatprep.subr.bf16.mxu0 0
    %181 = vmatpush1.bf16.msra.mxu0 %v160
    %182 = vmatprep.subr.bf16.mxu0 0
    %183 = vmatpush1.bf16.msra.mxu0 %v159
    %184 = vmatprep.subr.bf16.mxu0 0
    %185 = vmatpush1.bf16.msra.mxu0 %v158
    %186 = vmatprep.subr.bf16.mxu0 0
    %187 = vmatpush2.bf16.msra.mxu0 0
    %188 = vmatprep.subr.bf16.mxu0 0
    %189 = vmatpush2.bf16.msra.mxu0 0
    %190 = vmatprep.subr.bf16.mxu0 0
    %191 = vmatpush2.bf16.msra.mxu0 0
    %192 = vmatprep.subr.bf16.mxu0 0
    %193 = vmatpush2.bf16.msra.mxu0 0
    %194 = vmatprep.subr.bf16.mxu0 0
    %195 = vmatpush2.bf16.msra.mxu0 0
    %196 = vmatprep.subr.bf16.mxu0 0
    %197 = vmatpush2.bf16.msra.mxu0 0
    %198 = vmatprep.subr.bf16.mxu0 0
    %199 = vmatpush2.bf16.msra.mxu0 0
    %200 = vmatprep.subr.bf16.mxu0 0
    %201 = vmatpush2.bf16.msra.mxu0 0
    %202 = vmatprep.mubr.bf16.mxu0 0
    %203 = vmatmul.mubr.bf16.gmra.mxu0 %v168
    %v204 = vpop.f32.mrf.mxu0
    %v205 = vadd.f32 %v140, %v204
    %v206 = vpop.f32.mrf.mxu0
    %v207 = vpop.f32.mrf.mxu0
    %v208 = vadd.f32 %v140, %v207
    %v209 = vpop.f32.mrf.mxu0
    %210 = vdwg.mxu0
    %v211 = vmul.f32 %v205, 0.5
    %v212 = vmul.f32 %v208, 0.5
    %v213 = vmul.f32 %v205, 0.70710677
    %v214 = vmul.f32 %v208, 0.70710677
    %v215 = verf.f32.pop %v213
    %v216 = verf.f32.pop %v214
    %v217 = vadd.f32 %v215, 1.0
    %v218 = vadd.f32 %v216, 1.0
    %v219 = vmul.f32 %v211, %v217
    %v220 = vmul.f32 %v212, %v218
    %v221 = vpack.c.bf16 %v220, %v219
    %v222 = vld [vmem:[%s5] sm:$0xf]
    %v223 = vld [vmem:[%s5 + $0x4] sm:$0xf]
    %v224 = vld [vmem:[%s5 + $0x8] sm:$0xf]
    %v225 = vld [vmem:[%s5 + $0xc] sm:$0xf]
    %v226 = vld [vmem:[%s6] sm:$0x1]
    %v228 = vlaneseq
    %v229 = vshrl.u32 %v228, 7
    %v230 = vsub.s32 0, %v229
    %v231 = vrot.slane %v226, %v230
    %v237 = vunpack.c.l.b16 %v222
    %v238 = vunpack.c.l.b16 %v223
    %v239 = vunpack.c.l.b16 %v224
    %v240 = vunpack.c.l.b16 %v225
    %v241 = vpack.c.b16 %v238, %v237
    %v242 = vpack.c.b16 %v240, %v239
    %v246 = vsel %vm71, %v221, 0
    %248 = vmatprep.subr.bf16.mxu0 0
    %249 = vmatpush1.bf16.msra.mxu0 0
    %250 = vmatprep.subr.bf16.mxu0 0
    %251 = vmatpush1.bf16.msra.mxu0 0
    %252 = vmatprep.subr.bf16.mxu0 0
    %253 = vmatpush1.bf16.msra.mxu0 0
    %254 = vmatprep.subr.bf16.mxu0 0
    %255 = vmatpush1.bf16.msra.mxu0 0
    %256 = vmatprep.subr.bf16.mxu0 0
    %257 = vmatpush1.bf16.msra.mxu0 0
    %258 = vmatprep.subr.bf16.mxu0 0
    %259 = vmatpush1.bf16.msra.mxu0 0
    %260 = vmatprep.subr.bf16.mxu0 0
    %261 = vmatpush1.bf16.msra.mxu0 %v242
    %262 = vmatprep.subr.bf16.mxu0 0
    %263 = vmatpush1.bf16.msra.mxu0 %v241
    %264 = vmatprep.subr.bf16.mxu0 0
    %265 = vmatpush2.bf16.msra.mxu0 0
    %266 = vmatprep.subr.bf16.mxu0 0
    %267 = vmatpush2.bf16.msra.mxu0 0
    %268 = vmatprep.subr.bf16.mxu0 0
    %269 = vmatpush2.bf16.msra.mxu0 0
    %270 = vmatprep.subr.bf16.mxu0 0
    %271 = vmatpush2.bf16.msra.mxu0 0
    %272 = vmatprep.subr.bf16.mxu0 0
    %273 = vmatpush2.bf16.msra.mxu0 0
    %274 = vmatprep.subr.bf16.mxu0 0
    %275 = vmatpush2.bf16.msra.mxu0 0
    %276 = vmatprep.subr.bf16.mxu0 0
    %277 = vmatpush2.bf16.msra.mxu0 0
    %278 = vmatprep.subr.bf16.mxu0 0
    %279 = vmatpush2.bf16.msra.mxu0 0
    %280 = vmatprep.mubr.bf16.mxu0 0
    %281 = vmatmul.mubr.bf16.gmra.mxu0 %v246
    %v282 = vpop.f32.mrf.mxu0
    %v283 = vadd.f32 %v231, %v282
    %v284 = vpop.f32.mrf.mxu0
    %v285 = vpop.f32.mrf.mxu0
    %v286 = vadd.f32 %v231, %v285
    %v287 = vpop.f32.mrf.mxu0
    %288 = vdwg.mxu0
    %v289 = vld [vmem:[%s7] sm:$0xf]
    %v290 = vld [vmem:[%s7 + $0x4] sm:$0xf]
    %v291 = vld [vmem:[%s7 + $0x8] sm:$0xf]
    %v292 = vld [vmem:[%s7 + $0xc] sm:$0xf]
    %v293 = vld [vmem:[%s8] sm:$0x1]
    %v295 = vlaneseq
    %v296 = vshrl.u32 %v295, 7
    %v297 = vsub.s32 0, %v296
    %v298 = vrot.slane %v293, %v297
    %v304 = vunpack.c.l.b16 %v289
    %v305 = vunpack.c.l.b16 %v290
    %v306 = vunpack.c.l.b16 %v291
    %v307 = vunpack.c.l.b16 %v292
    %v308 = vpack.c.b16 %v305, %v304
    %v309 = vpack.c.b16 %v307, %v306
    %312 = vmatprep.subr.bf16.mxu0 0
    %313 = vmatpush1.bf16.msra.mxu0 0
    %314 = vmatprep.subr.bf16.mxu0 0
    %315 = vmatpush1.bf16.msra.mxu0 0
    %316 = vmatprep.subr.bf16.mxu0 0
    %317 = vmatpush1.bf16.msra.mxu0 0
    %318 = vmatprep.subr.bf16.mxu0 0
    %319 = vmatpush1.bf16.msra.mxu0 0
    %320 = vmatprep.subr.bf16.mxu0 0
    %321 = vmatpush1.bf16.msra.mxu0 0
    %322 = vmatprep.subr.bf16.mxu0 0
    %323 = vmatpush1.bf16.msra.mxu0 0
    %324 = vmatprep.subr.bf16.mxu0 0
    %325 = vmatpush1.bf16.msra.mxu0 %v309
    %326 = vmatprep.subr.bf16.mxu0 0
    %327 = vmatpush1.bf16.msra.mxu0 %v308
    %328 = vmatprep.subr.bf16.mxu0 0
    %329 = vmatpush2.bf16.msra.mxu0 0
    %330 = vmatprep.subr.bf16.mxu0 0
    %331 = vmatpush2.bf16.msra.mxu0 0
    %332 = vmatprep.subr.bf16.mxu0 0
    %333 = vmatpush2.bf16.msra.mxu0 0
    %334 = vmatprep.subr.bf16.mxu0 0
    %335 = vmatpush2.bf16.msra.mxu0 0
    %336 = vmatprep.subr.bf16.mxu0 0
    %337 = vmatpush2.bf16.msra.mxu0 0
    %338 = vmatprep.subr.bf16.mxu0 0
    %339 = vmatpush2.bf16.msra.mxu0 0
    %340 = vmatprep.subr.bf16.mxu0 0
    %341 = vmatpush2.bf16.msra.mxu0 0
    %342 = vmatprep.subr.bf16.mxu0 0
    %343 = vmatpush2.bf16.msra.mxu0 0
    %344 = vmatprep.mubr.bf16.mxu0 0
    %345 = vmatmul.mubr.bf16.gmra.mxu0 %v246
    %v346 = vpop.f32.mrf.mxu0
    %v347 = vadd.f32 %v298, %v346
    %v348 = vpop.f32.mrf.mxu0
    %v349 = vpop.f32.mrf.mxu0
    %v350 = vadd.f32 %v298, %v349
    %v351 = vpop.f32.mrf.mxu0
    %352 = vdwg.mxu0
    %vm353 = vcmp.gt.f32.partialorder %v347, 20.0
    %vm354 = vcmp.gt.f32.partialorder %v350, 20.0
    %v355 = vmin.f32 %v347, 20.0
    %v356 = vmin.f32 %v350, 20.0
    %v357 = vmul.f32 %v355, 1.442695
    %v358 = vpow.pop %v357
    %v359 = vmul.f32 %v356, 1.442695
    %v360 = vpow.pop %v359
    %v361 = vadd.f32 %v358, 1.0
    %v362 = vlog2.pop %v361
    %v363 = vmul.f32 %v362, 0.6931472
    %v364 = vmul.f32 -0.5, %v358
    %v365 = vadd.f32 %v364, 1.0
    %v366 = vmul.f32 %v365, %v358
    %v367 = vand.u32 2147483647, %v358
    %vm368 = vcmp.lt.f32.partialorder %v367, 0.0004427343
    %v369 = vsel %vm368, %v366, %v363
    %v370 = vadd.f32 %v360, 1.0
    %v371 = vlog2.pop %v370
    %v372 = vmul.f32 %v371, 0.6931472
    %v373 = vmul.f32 -0.5, %v360
    %v374 = vadd.f32 %v373, 1.0
    %v375 = vmul.f32 %v374, %v360
    %v376 = vand.u32 2147483647, %v360
    %vm377 = vcmp.lt.f32.partialorder %v376, 0.0004427343
    %v378 = vsel %vm377, %v375, %v372
    %v379 = vsel %vm353, %v347, %v369
    %v380 = vsel %vm354, %v350, %v378
    %v381 = vmul.f32 %v379, 1.442695
    %v382 = vpow.pop %v381
    %v383 = vmul.f32 %v380, 1.442695
    %v384 = vpow.pop %v383
    %v385 = vmul.f32 %v382, 1.6487212
    %v386 = vmul.f32 %v384, 1.6487212
    %vm387 = vcmask 130048
    %388 = vst.msk [vmem:[#allocation2] sm:$0xff] %vm387, %v283
    %389 = vst.msk [vmem:[#allocation2 + $0x8] sm:$0xff] %vm387, %v286
    %390 = vst.msk [vmem:[#allocation4] sm:$0xff] %vm387, %v379
    %391 = vst.msk [vmem:[#allocation4 + $0x8] sm:$0xff] %vm387, %v380
    %v392 = vld [vmem:[%s9] sm:$0xff]
    %v393 = vld [vmem:[%s9 + $0x8] sm:$0xff]
    %v394 = vmul.f32 %v392, %v385
    %v395 = vmul.f32 %v393, %v386
    %v396 = vadd.f32 %v394, %v283
    %v397 = vadd.f32 %v395, %v286
    %398 = vst.msk [vmem:[#allocation6] sm:$0xff] %vm387, %v396
    %399 = vst.msk [vmem:[#allocation6 + $0x8] sm:$0xff] %vm387, %v397
    // Predicated region
    $region42: #{encoder_forward.1} parent=1 // pred_check
      _
    $region43: #{encoder_forward.1} parent=1 // pred_check_branch
      %401 = sbr.rel (0) target = $region45
    $region44: #{encoder_forward.1} parent=1 // pred_region
      %s403 = ssub.s32 256, 256
      %404 = vsyncadd [#allocation3], %s403
      %s405 = sshll.u32 [#allocation2], 4
      %s406 = int_to_ptr.vmem [resolvable:$true] %s405
      %411 = dma.vmem_to_hbm [thread:$0]  %s406, 256, %s10, [#allocation3], 128, 128, 8
    $region45: #{encoder_forward.1} parent=1 // pred_fallthru
      _
    // Predicated region
    $region46: #{encoder_forward.1} parent=1 // pred_check
      _
    $region47: #{encoder_forward.1} parent=1 // pred_check_branch
      %413 = sbr.rel (0) target = $region49
    $region48: #{encoder_forward.1} parent=1 // pred_region
      %s415 = ssub.s32 256, 256
      %416 = vsyncadd [#allocation5], %s415
      %s417 = sshll.u32 [#allocation4], 4
      %s418 = int_to_ptr.vmem [resolvable:$true] %s417
      %423 = dma.vmem_to_hbm [thread:$0]  %s418, 256, %s11, [#allocation5], 128, 128, 8
    $region49: #{encoder_forward.1} parent=1 // pred_fallthru
      _
    // Predicated region
    $region50: #{encoder_forward.1} parent=1 // pred_check
      _
    $region51: #{encoder_forward.1} parent=1 // pred_check_branch
      %425 = sbr.rel (0) target = $region53
    $region52: #{encoder_forward.1} parent=1 // pred_region
      %s427 = ssub.s32 256, 256
      %428 = vsyncadd [#allocation5], %s427
      %s429 = sshll.u32 [#allocation6], 4
      %s430 = int_to_ptr.vmem [resolvable:$true] %s429
      %435 = dma.vmem_to_hbm [thread:$0]  %s430, 256, %s12, [#allocation5], 128, 128, 8
    $region53: #{encoder_forward.1} parent=1 // pred_fallthru
      _
    // Predicated region
    $region54: #{encoder_forward.1} parent=1 // pred_check
      _
    $region55: #{encoder_forward.1} parent=1 // pred_check_branch
      %437 = sbr.rel (0) target = $region57
    $region56: #{encoder_forward.1} parent=1 // pred_region
      %438 = dma.done [#allocation3], 256
    $region57: #{encoder_forward.1} parent=1 // pred_fallthru
      _
    // Predicated region
    $region58: #{encoder_forward.1} parent=1 // pred_check
      _
    $region59: #{encoder_forward.1} parent=1 // pred_check_branch
      %440 = sbr.rel (0) target = $region61
    $region60: #{encoder_forward.1} parent=1 // pred_region
      %441 = dma.done [#allocation5], 256
    $region61: #{encoder_forward.1} parent=1 // pred_fallthru
      _
    // Predicated region
    $region62: #{encoder_forward.1} parent=1 // pred_check
      _
    $region63: #{encoder_forward.1} parent=1 // pred_check_branch
      %443 = sbr.rel (0) target = $region65
    $region64: #{encoder_forward.1} parent=1 // pred_region
      %444 = dma.done [#allocation5], 256
    $region65: #{encoder_forward.1} parent=1 // pred_fallthru
      _
    %445 = vsyncpa [#allocation3], 1
    %446 = vsyncpa [#allocation5], 1

</llo_original>
